<compile_context>
chip_gen: v6e
topology: v6e:2x2x1
jax: 0.10.0
libtpu: 0.0.40
codegen_flags: <defaults>
</compile_context>

<pallas_src>
import functools

import jax
import jax.numpy as jnp
from jax.experimental import pallas as pl
from jax.experimental.pallas import tpu as pltpu


def _round_up(x, m):
    return (x + m - 1) // m * m


def _pick_tile(dim_pad, max_tile, align=128):
    """Largest tile <= max_tile, multiple of `align`, dividing dim_pad."""
    t = min(max_tile, dim_pad)
    t = max((t // align) * align, align)
    while dim_pad % t != 0:
        t -= align
    return t


def _hw_defaults():
    """(max_tm, max_tn, max_tk, vmem_limit_bytes) derived from VMEM capacity."""
    vmem_cap = None
    try:
        vmem_cap = pltpu.get_tpu_info().vmem_capacity_bytes
    except Exception:  # pragma: no cover - fall back to conservative config
        vmem_cap = None
    if vmem_cap is not None and vmem_cap >= 96 * 1024 * 1024:
        # 128 MiB VMEM generation (v5e / v6e): big tiles, compute-bound.
        return 1024, 2048, 1024, 100 * 1024 * 1024
    # 64 MiB-per-TC generation (v7x) or unknown: conservative, leave headroom.
    return 512, 1024, 1024, 48 * 1024 * 1024


def _linear_bias_kernel(x_ref, w_ref, b_ref, o_ref, acc_ref):
    # x_ref  : [tm, tk] bf16
    # w_ref  : [tk, tn] bf16   (weight pre-transposed to [K, N] at init)
    # b_ref  : [1,  tn] f32
    # o_ref  : [tm, tn] x.dtype
    # acc_ref: [tm, tn] f32 scratch accumulator (resident across the K axis)
    k = pl.program_id(2)

    @pl.when(k == 0)
    def _():
        acc_ref[...] = jnp.zeros_like(acc_ref)

    acc_ref[...] += jnp.dot(
        x_ref[...], w_ref[...], preferred_element_type=jnp.float32
    )

    @pl.when(k == pl.num_programs(2) - 1)
    def _():
        o_ref[...] = (acc_ref[...] + b_ref[...]).astype(o_ref.dtype)


class LlamaLinearBias:
    """Pallas-TPU equivalent of the PyTorch LlamaLinear_bias module.

    Weight/bias preprocessing (cast, [K, N] transpose, padding) is done once
    at construction time; __call__ only pads/reshapes the activation.
    """

    def __init__(self, weight, bias, *, max_tm=None, max_tn=None, max_tk=None,
                 vmem_limit_bytes=None):
        hw_tm, hw_tn, hw_tk, hw_vmem = _hw_defaults()
        self.max_tm = max_tm or hw_tm
        max_tn = max_tn or hw_tn
        max_tk = max_tk or hw_tk
        self.vmem_limit_bytes = vmem_limit_bytes or hw_vmem

        weight = jnp.asarray(weight)
        self.out_features, self.in_features = weight.shape

        self.n_pad = _round_up(self.out_features, 128)
        self.k_pad = _round_up(self.in_features, 128)
        # Divisor-aware tiles: no per-call weight pad / output slice for
        # 128-aligned Llama dims (4096, 11008, 14336, ...).
        self.tn = _pick_tile(self.n_pad, max_tn)
        self.tk = _pick_tile(self.k_pad, max_tk)

        # One-time weight prep: bf16, [K, N] (canonical MXU stationary layout).
        w = weight.astype(jnp.bfloat16).T  # [K, N]
        if w.shape != (self.k_pad, self.n_pad):
            w = jnp.pad(w, ((0, self.k_pad - self.in_features),
                            (0, self.n_pad - self.out_features)))
        self.w_kn = w

        b = jnp.asarray(bias).reshape(1, -1).astype(jnp.float32)  # robust to 1-D bias
        if b.shape[1] != self.n_pad:
            b = jnp.pad(b, ((0, 0), (0, self.n_pad - self.out_features)))
        self.bias = b

    @functools.partial(jax.jit, static_argnums=0)
    def __call__(self, x):
        x_dtype = x.dtype
        lead_shape = x.shape[:-1]
        m = 1
        for d in lead_shape:
            m *= d

        # tm: multiple of 16 (bf16 sublane packing), shrunk for tiny M.
        tm = min(self.max_tm, _round_up(max(m, 1), 16))
        m_pad = _round_up(m, tm)

        x2d = x.reshape(m, self.in_features).astype(jnp.bfloat16)
        if (m_pad, self.k_pad) != x2d.shape:
            x2d = jnp.pad(x2d, ((0, m_pad - m),
                                (0, self.k_pad - self.in_features)))

        tn, tk = self.tn, self.tk
        grid = (m_pad // tm, self.n_pad // tn, self.k_pad // tk)

        cost = pl.CostEstimate(
            flops=2 * m * self.in_features * self.out_features,
            transcendentals=0,
            bytes_accessed=(x2d.size * 2 + self.w_kn.size * 2
                            + self.bias.size * 4
                            + m * self.out_features
                            * jnp.dtype(x_dtype).itemsize),
        )

        out = pl.pallas_call(
            _linear_bias_kernel,
            out_shape=jax.ShapeDtypeStruct((m_pad, self.n_pad), x_dtype),
            grid_spec=pltpu.PrefetchScalarGridSpec(
                num_scalar_prefetch=0,
                grid=grid,
                in_specs=[
                    pl.BlockSpec((tm, tk), lambda i, j, k: (i, k)),  # x tile
                    pl.BlockSpec((tk, tn), lambda i, j, k: (k, j)),  # weight tile
                    pl.BlockSpec((1, tn), lambda i, j, k: (0, j)),   # bias tile
                ],
                out_specs=pl.BlockSpec((tm, tn), lambda i, j, k: (i, j)),
                scratch_shapes=[pltpu.VMEM((tm, tn), jnp.float32)],
            ),
            compiler_params=pltpu.CompilerParams(
                dimension_semantics=("parallel", "parallel", "arbitrary"),
                vmem_limit_bytes=self.vmem_limit_bytes,
            ),
            cost_estimate=cost,
        )(x2d, self.w_kn, self.bias)

        if (m_pad, self.n_pad) != (m, self.out_features):
            out = out[:m, :self.out_features]
        return out.reshape(*lead_shape, self.out_features)


def llama_linear_bias(x, weight, bias, **kwargs):
    """Functional convenience wrapper (does the one-time prep per call)."""
    return LlamaLinearBias(weight, bias, **kwargs)(x)


if __name__ == "__main__":
    # Small, deterministic example consistent with a Llama-style linear.
    batch, seq = 2, 8
    in_features, out_features = 32, 64

    key = jax.random.PRNGKey(0)
    kx, kw, kb = jax.random.split(key, 3)

    x = jax.random.normal(kx, (batch, seq, in_features), dtype=jnp.float32)
    # torch.float16 buffers -> bf16 surrogate on TPU
    weight = jax.random.normal(kw, (out_features, in_features),
                               dtype=jnp.float32).astype(jnp.bfloat16)
    bias = jax.random.normal(kb, (1, out_features),
                             dtype=jnp.float32).astype(jnp.bfloat16)

    layer = LlamaLinearBias(weight, bias)
    y = jax.block_until_ready(layer(x))

    # Reference with matching precision semantics:
    # bf16 operands, f32 accumulation, bias add in f32, cast back to x.dtype.
    y_ref = (jnp.dot(x.astype(jnp.bfloat16),
                     weight.astype(jnp.bfloat16).T,
                     preferred_element_type=jnp.float32)
             + bias.astype(jnp.float32)).astype(x.dtype)

    assert y.shape == (batch, seq, out_features)
    assert y.dtype == x.dtype
    assert jnp.allclose(y, y_ref, atol=5e-2, rtol=5e-2)

    print("KERNEL_OK")
</pallas_src>

<mosaic_0001>
module attributes {stable_mosaic.version = 11 : i64} {
  func.func @_linear_bias_kernel(%arg0: i32, %arg1: i32, %arg2: i32, %arg3: memref<16x128xbf16, #tpu.memory_space<vmem>>, %arg4: memref<128x128xbf16, #tpu.memory_space<vmem>>, %arg5: memref<1x128xf32, #tpu.memory_space<vmem>>, %arg6: memref<16x128xf32, #tpu.memory_space<vmem>>, %arg7: memref<16x128xf32, #tpu.memory_space<vmem>>) attributes {dimension_semantics = [#tpu.dimension_semantics<parallel>, #tpu.dimension_semantics<parallel>, #tpu.dimension_semantics<arbitrary>], iteration_bounds = array<i64: 1, 1, 1>, scalar_prefetch = 0 : i64, scratch_operands = 1 : i64, tpu.core_type = #tpu.core_type<tc>, window_params = [{transform_indices = @transform_0, window_bounds = array<i64: 16, 128>}, {transform_indices = @transform_1, window_bounds = array<i64: 128, 128>}, {transform_indices = @transform_2, window_bounds = array<i64: 1, 128>}, {transform_indices = @transform_3, window_bounds = array<i64: 16, 128>}]} {
    %c0_i32 = arith.constant 0 : i32
    %0 = arith.cmpi eq, %arg2, %c0_i32 : i32
    %1 = arith.extui %0 : i1 to i32
    %c0_i32_0 = arith.constant 0 : i32
    %2 = arith.cmpi ne, %1, %c0_i32_0 : i32
    scf.if %2 {
      %cst_10 = arith.constant 0.000000e+00 : f32
      %12 = vector.broadcast %cst_10 : f32 to vector<16x128xf32>
      %c0_11 = arith.constant 0 : index
      %c0_12 = arith.constant 0 : index
      %13 = vector.load %arg7[%c0_11, %c0_12] : memref<16x128xf32, #tpu.memory_space<vmem>>, vector<16x128xf32>
      tpu.vector_store %arg7[%c0_11, %c0_12], %12 {strides = array<i32>} : memref<16x128xf32, #tpu.memory_space<vmem>>, vector<16x128xf32>,
    } else {
    }
    %c0 = arith.constant 0 : index
    %c0_1 = arith.constant 0 : index
    %3 = vector.load %arg7[%c0, %c0_1] : memref<16x128xf32, #tpu.memory_space<vmem>>, vector<16x128xf32>
    %c0_2 = arith.constant 0 : index
    %c0_3 = arith.constant 0 : index
    %4 = vector.load %arg3[%c0_2, %c0_3] : memref<16x128xbf16, #tpu.memory_space<vmem>>, vector<16x128xbf16>
    %c0_4 = arith.constant 0 : index
    %c0_5 = arith.constant 0 : index
    %5 = vector.load %arg4[%c0_4, %c0_5] : memref<128x128xbf16, #tpu.memory_space<vmem>>, vector<128x128xbf16>
    %cst = arith.constant dense<0.000000e+00> : vector<16x128xf32>
    %6 = tpu.matmul %4, %5, %cst {dimension_numbers = #tpu.dot_dimension_numbers<[1], [0], [0], [1], [0, 0, 1, 1], [], []>} : vector<16x128xbf16>, vector<128x128xbf16>, vector<16x128xf32> -> vector<16x128xf32>
    %7 = arith.addf %3, %6 : vector<16x128xf32>
    %c0_6 = arith.constant 0 : index
    %c0_7 = arith.constant 0 : index
    %8 = vector.load %arg7[%c0_6, %c0_7] : memref<16x128xf32, #tpu.memory_space<vmem>>, vector<16x128xf32>
    tpu.vector_store %arg7[%c0_6, %c0_7], %7 {strides = array<i32>} : memref<16x128xf32, #tpu.memory_space<vmem>>, vector<16x128xf32>,
    %c0_i32_8 = arith.constant 0 : i32
    %9 = arith.cmpi eq, %arg2, %c0_i32_8 : i32
    %10 = arith.extui %9 : i1 to i32
    %c0_i32_9 = arith.constant 0 : i32
    %11 = arith.cmpi ne, %10, %c0_i32_9 : i32
    scf.if %11 {
      %c0_10 = arith.constant 0 : index
      %c0_11 = arith.constant 0 : index
      %12 = vector.load %arg7[%c0_10, %c0_11] : memref<16x128xf32, #tpu.memory_space<vmem>>, vector<16x128xf32>
      %c0_12 = arith.constant 0 : index
      %c0_13 = arith.constant 0 : index
      %13 = vector.load %arg5[%c0_12, %c0_13] : memref<1x128xf32, #tpu.memory_space<vmem>>, vector<1x128xf32>
      %14 = vector.broadcast %13 : vector<1x128xf32> to vector<16x128xf32>
      %15 = arith.addf %12, %14 : vector<16x128xf32>
      %c0_14 = arith.constant 0 : index
      %c0_15 = arith.constant 0 : index
      %16 = vector.load %arg6[%c0_14, %c0_15] : memref<16x128xf32, #tpu.memory_space<vmem>>, vector<16x128xf32>
      tpu.vector_store %arg6[%c0_14, %c0_15], %15 {strides = array<i32>} : memref<16x128xf32, #tpu.memory_space<vmem>>, vector<16x128xf32>,
    } else {
    }
    return
  }
  func.func @transform_0(%arg0: i32, %arg1: i32, %arg2: i32) -> (i32, i32) {
    %c0_i32 = arith.constant 0 : i32
    return %arg0, %arg2 : i32, i32
  }
  func.func @transform_1(%arg0: i32, %arg1: i32, %arg2: i32) -> (i32, i32) {
    %c0_i32 = arith.constant 0 : i32
    return %arg2, %arg1 : i32, i32
  }
  func.func @transform_2(%arg0: i32, %arg1: i32, %arg2: i32) -> (i32, i32) {
    %c0_i32 = arith.constant 0 : i32
    %c0_i32_0 = arith.constant 0 : i32
    return %c0_i32, %arg1 : i32, i32
  }
  func.func @transform_3(%arg0: i32, %arg1: i32, %arg2: i32) -> (i32, i32) {
    %c0_i32 = arith.constant 0 : i32
    return %arg0, %arg1 : i32, i32
  }
}

</mosaic_0001>

<llo_original>
// kernel: a_call__.1
$region0: #{a_call__.1}
  #allocation0 [shape = 'u32[]', space=smem, size = 0x4, offset = 0x4, fixed_abs, tag = 'smem constant byte address 0x4 - core index']
  #allocation1 [shape = 'u32[144,128]{1,0:T(1,128)}', space=vmem, size = 0x12000, scoped, tag = 'internal scratch']
  #allocation2 [shape = 'f32[16,128]{1,0:T(8,128)}', space=vmem, size = 0x2000, scoped, tag = 'scratch operand']
  %s0 = inlined_call_operand.vmem [shape: bf16[16,128], index: 0, kind: input, shape index: {}]
  %s1 = inlined_call_operand.hbm [shape: bf16[128,128], index: 1, kind: input, shape index: {}]
  %s2 = inlined_call_operand.vmem [shape: f32[1,128], index: 2, kind: input, shape index: {}]
  %s3 = inlined_call_operand.vmem [shape: f32[16,128], index: 3, kind: output, shape index: {}]
  %s4 = sld [smem:[#allocation0]]
  $region34: #{a_call__.1} parent=0
    _
  %s6 = ssub.s32 1, %s4
  %s7 = scalar_select 0, %s6, %s4
  $region1: #{a_call__.1} parent=0
    #allocation3 [shape = 'u8[32768]{0}', space=vmem, size = 0x8000, scoped, tag = 'input window, operand 1, single buffered']
    #allocation4 [shape = 's32[1]{0}', space=sflag, size = 0x4, scoped, tag = 'scoped memory for a_call__.1']
    %8 = vsyncpa [#allocation4], 0
    // Predicated region
    $region2: #{a_call__.1} parent=1 // pred_check
      _
    $region3: #{a_call__.1} parent=1 // pred_check_branch
      %10 = sbr.rel (0) target = $region5
    $region4: #{a_call__.1} parent=1 // pred_region
      _
    $region5: #{a_call__.1} parent=1 // pred_fallthru
      _
    // Predicated region
    $region6: #{a_call__.1} parent=1 // pred_check
      _
    $region7: #{a_call__.1} parent=1 // pred_check_branch
      %12 = sbr.rel (0) target = $region9
    $region8: #{a_call__.1} parent=1 // pred_region
      %s14 = ssub.s32 1024, 1024
      %15 = vsyncadd [#allocation4], %s14
      %s16 = sshll.u32 [#allocation3], 4
      %s17 = int_to_ptr.vmem [resolvable:$true] %s16
      %22 = dma.hbm_to_vmem [thread:$0]  %s1, 1024, %s17, [#allocation4], 64, 64, 4
    $region9: #{a_call__.1} parent=1 // pred_fallthru
      _
    // Predicated region
    $region10: #{a_call__.1} parent=1 // pred_check
      _
    $region11: #{a_call__.1} parent=1 // pred_check_branch
      %24 = sbr.rel (0) target = $region13
    $region12: #{a_call__.1} parent=1 // pred_region
      _
    $region13: #{a_call__.1} parent=1 // pred_fallthru
      _
    // Predicated region
    $region14: #{a_call__.1} parent=1 // pred_check
      _
    $region15: #{a_call__.1} parent=1 // pred_check_branch
      %26 = sbr.rel (0) target = $region17
    $region16: #{a_call__.1} parent=1 // pred_region
      %27 = dma.done [#allocation4], 1024
    $region17: #{a_call__.1} parent=1 // pred_fallthru
      _
    %p29 = scmp.eq.s32.totalorder 0, 0
    // Predicated region
    $region18: #{a_call__.1} parent=1 // pred_check
      %p30 = pneg %p29
    $region19: #{a_call__.1} parent=1 // pred_check_branch
      %32 = sbr.rel (%p30) target = $region21
    $region20: #{a_call__.1} parent=1 // pred_region
      %33 = vst [vmem:[#allocation2] sm:$0xff] 0.0
      %34 = vst [vmem:[#allocation2 + $0x8] sm:$0xff] 0.0
    $region21: #{a_call__.1} parent=1 // pred_fallthru
      _
    %v35 = vld [vmem:[#allocation2] sm:$0xff]
    %v36 = vld [vmem:[#allocation2 + $0x8] sm:$0xff]
    %v37 = vld [vmem:[%s0] sm:$0xf]
    %v38 = vld [vmem:[%s0 + $0x4] sm:$0xf]
    %v39 = vld [vmem:[#allocation3] sm:$0xf]
    %v40 = vld [vmem:[#allocation3 + $0x4] sm:$0xf]
    %v41 = vld [vmem:[#allocation3 + $0x8] sm:$0xf]
    %v42 = vld [vmem:[#allocation3 + $0xc] sm:$0xf]
    %v43 = vld [vmem:[#allocation3 + $0x10] sm:$0xf]
    %v44 = vld [vmem:[#allocation3 + $0x14] sm:$0xf]
    %v45 = vld [vmem:[#allocation3 + $0x18] sm:$0xf]
    %v46 = vld [vmem:[#allocation3 + $0x1c] sm:$0xf]
    %v47 = vld [vmem:[#allocation3 + $0x20] sm:$0xf]
    %v48 = vld [vmem:[#allocation3 + $0x24] sm:$0xf]
    %v49 = vld [vmem:[#allocation3 + $0x28] sm:$0xf]
    %v50 = vld [vmem:[#allocation3 + $0x2c] sm:$0xf]
    %v51 = vld [vmem:[#allocation3 + $0x30] sm:$0xf]
    %v52 = vld [vmem:[#allocation3 + $0x34] sm:$0xf]
    %v53 = vld [vmem:[#allocation3 + $0x38] sm:$0xf]
    %v54 = vld [vmem:[#allocation3 + $0x3c] sm:$0xf]
    %v57 = vunpack.c.l.b16 %v37
    %v58 = vunpack.c.l.b16 %v38
    %v59 = vpack.c.b16 %v58, %v57
    %v77 = vunpack.c.l.b16 %v39
    %v78 = vunpack.c.l.b16 %v40
    %v79 = vunpack.c.l.b16 %v41
    %v80 = vunpack.c.l.b16 %v42
    %v81 = vunpack.c.l.b16 %v43
    %v82 = vunpack.c.l.b16 %v44
    %v83 = vunpack.c.l.b16 %v45
    %v84 = vunpack.c.l.b16 %v46
    %v85 = vunpack.c.l.b16 %v47
    %v86 = vunpack.c.l.b16 %v48
    %v87 = vunpack.c.l.b16 %v49
    %v88 = vunpack.c.l.b16 %v50
    %v89 = vunpack.c.l.b16 %v51
    %v90 = vunpack.c.l.b16 %v52
    %v91 = vunpack.c.l.b16 %v53
    %v92 = vunpack.c.l.b16 %v54
    %v93 = vpack.c.b16 %v78, %v77
    %v94 = vpack.c.b16 %v80, %v79
    %v95 = vpack.c.b16 %v82, %v81
    %v96 = vpack.c.b16 %v84, %v83
    %v97 = vpack.c.b16 %v86, %v85
    %v98 = vpack.c.b16 %v88, %v87
    %v99 = vpack.c.b16 %v90, %v89
    %v100 = vpack.c.b16 %v92, %v91
    %109 = vmatprep.subr.bf16.mxu0 0
    %110 = vmatpush1.bf16.msra.mxu0 %v100
    %111 = vmatprep.subr.bf16.mxu0 0
    %112 = vmatpush1.bf16.msra.mxu0 %v99
    %113 = vmatprep.subr.bf16.mxu0 0
    %114 = vmatpush1.bf16.msra.mxu0 %v98
    %115 = vmatprep.subr.bf16.mxu0 0
    %116 = vmatpush1.bf16.msra.mxu0 %v97
    %117 = vmatprep.subr.bf16.mxu0 0
    %118 = vmatpush1.bf16.msra.mxu0 %v96
    %119 = vmatprep.subr.bf16.mxu0 0
    %120 = vmatpush1.bf16.msra.mxu0 %v95
    %121 = vmatprep.subr.bf16.mxu0 0
    %122 = vmatpush1.bf16.msra.mxu0 %v94
    %123 = vmatprep.subr.bf16.mxu0 0
    %124 = vmatpush1.bf16.msra.mxu0 %v93
    %125 = vmatprep.subr.bf16.mxu0 0
    %126 = vmatpush2.bf16.msra.mxu0 0
    %127 = vmatprep.subr.bf16.mxu0 0
    %128 = vmatpush2.bf16.msra.mxu0 0
    %129 = vmatprep.subr.bf16.mxu0 0
    %130 = vmatpush2.bf16.msra.mxu0 0
    %131 = vmatprep.subr.bf16.mxu0 0
    %132 = vmatpush2.bf16.msra.mxu0 0
    %133 = vmatprep.subr.bf16.mxu0 0
    %134 = vmatpush2.bf16.msra.mxu0 0
    %135 = vmatprep.subr.bf16.mxu0 0
    %136 = vmatpush2.bf16.msra.mxu0 0
    %137 = vmatprep.subr.bf16.mxu0 0
    %138 = vmatpush2.bf16.msra.mxu0 0
    %139 = vmatprep.subr.bf16.mxu0 0
    %140 = vmatpush2.bf16.msra.mxu0 0
    %141 = vmatprep.mubr.bf16.mxu0 0
    %142 = vmatmul.mubr.bf16.gmra.mxu0 %v59
    %v143 = vpop.f32.mrf.mxu0
    %v144 = vadd.f32 0.0, %v143
    %v145 = vpop.f32.mrf.mxu0
    %v146 = vpop.f32.mrf.mxu0
    %v147 = vadd.f32 0.0, %v146
    %v148 = vpop.f32.mrf.mxu0
    %149 = vdwg.mxu0
    %v150 = vadd.f32 %v35, %v144
    %v151 = vadd.f32 %v36, %v147
    %152 = vst [vmem:[#allocation2] sm:$0xff] %v150
    %153 = vst [vmem:[#allocation2 + $0x8] sm:$0xff] %v151
    // Predicated region
    $region22: #{a_call__.1} parent=1 // pred_check
      %p154 = pneg %p29
    $region23: #{a_call__.1} parent=1 // pred_check_branch
      %156 = sbr.rel (%p154) target = $region25
    $region24: #{a_call__.1} parent=1 // pred_region
      %v157 = vld [vmem:[#allocation2] sm:$0xff]
      %v158 = vld [vmem:[#allocation2 + $0x8] sm:$0xff]
      %v159 = vld [vmem:[%s2] sm:$0x1]
      %v161 = vlaneseq
      %v162 = vshrl.u32 %v161, 7
      %v163 = vsub.s32 0, %v162
      %v164 = vrot.slane %v159, %v163
      %v166 = vadd.f32 %v157, %v164
      %v167 = vadd.f32 %v158, %v164
      %168 = vst [vmem:[%s3] sm:$0xff] %v166
      %169 = vst [vmem:[%s3 + $0x8] sm:$0xff] %v167
    $region25: #{a_call__.1} parent=1 // pred_fallthru
      _
    // Predicated region
    $region26: #{a_call__.1} parent=1 // pred_check
      _
    $region27: #{a_call__.1} parent=1 // pred_check_branch
      %171 = sbr.rel (0) target = $region29
    $region28: #{a_call__.1} parent=1 // pred_region
      _
    $region29: #{a_call__.1} parent=1 // pred_fallthru
      _
    // Predicated region
    $region30: #{a_call__.1} parent=1 // pred_check
      _
    $region31: #{a_call__.1} parent=1 // pred_check_branch
      %173 = sbr.rel (0) target = $region33
    $region32: #{a_call__.1} parent=1 // pred_region
      _
    $region33: #{a_call__.1} parent=1 // pred_fallthru
      _
    %174 = vsyncpa [#allocation4], 1

</llo_original>
